<compile_context>
chip_gen: v5e
topology: v5e:2x2
jax: 0.10.0
libtpu: 0.0.40
codegen_flags: <defaults>
</compile_context>

<pallas_src>
import math
import jax
import jax.numpy as jnp
from jax import lax
from jax.experimental import pallas as pl
from jax.experimental.pallas import tpu as pltpu


def gdn_kernel(x_ref, xt_ref, wbig_ref, wrow_ref, emb2_ref, mask_ref, ep_ref,
               bout_ref, o_ref):
    # x_ref    : [1, N, S+1]  per-batch windows, last column = emb @ att_em_i
    # xt_ref   : [1, S+1, N]  transposed windows, last row  = emb @ att_em_j
    # wbig_ref : [S+1, D+1]   [[W_lin | W_lin@att_i], [0 | 1]]
    # wrow_ref : [1, S+1]     [W_lin@att_j | 1]
    # emb2_ref : [N, D]       W_emb * bn2_scale (BN2 scale folded into embedding)
    # mask_ref : [N, N]       1.0 = edge j->n active (topk w/o self + self-loop)
    # ep_ref   : [4, D]       rows: bn1_scale, bn1_shift(+bias), bn2_shift, w_out
    # bout_ref : [1]  (SMEM)  OutLayer scalar bias
    # o_ref    : [N, 1]
    d = emb2_ref.shape[1]
    x = x_ref[0]                                                     # [N, S+1]
    xt = xt_ref[0]                                                   # [S+1, N]

    # One fused MXU matmul -> x_lin and the target attention score column.
    xw = jnp.dot(x, wbig_ref[...], preferred_element_type=jnp.float32)  # [N, D+1]
    x_lin = xw[:, :d]                                                # [N, D]
    a_tgt = xw[:, d:d + 1]                                           # [N, 1]

    # Source attention scores, lane-dense as a row.
    a_src = jnp.dot(wrow_ref[...], xt, preferred_element_type=jnp.float32)  # [1, N]

    # Dense masked attention over the learned graph (vectorized softmax).
    mask = mask_ref[...]                                             # [N, N]
    logit = a_tgt + a_src                                            # [N, N]
    logit = jnp.where(logit >= 0, logit, 0.2 * logit)                # LeakyReLU(0.2)
    logit = jnp.where(mask > 0.5, logit, jnp.float32(-1e30))
    mmax = jnp.max(logit, axis=-1, keepdims=True)                    # [N, 1]
    p = jnp.exp(logit - mmax) * mask                                 # masked exps
    denom = jnp.sum(p, axis=-1, keepdims=True)                       # >0: self-loop always active
    alpha = p * pl.reciprocal(denom, approx=True)                    # [N, N]

    # Aggregation (MXU) + GraphLayer bias / BN1 / ReLU (folded scale+shift).
    agg = jnp.dot(alpha, x_lin, preferred_element_type=jnp.float32)  # [N, D]
    ep = ep_ref[...]
    gcn = jnp.maximum(agg * ep[0:1, :] + ep[1:2, :], 0.0)

    # GDN: gcn * embedding -> BN2 (scale folded into emb2) -> ReLU.
    out = jnp.maximum(gcn * emb2_ref[...] + ep[2:3, :], 0.0)

    # OutLayer Linear(D, 1) as VPU multiply + lane reduction (no 1-lane matmul).
    res = jnp.sum(out * ep[3:4, :], axis=-1, keepdims=True) + bout_ref[0]
    o_ref[...] = res                                                 # [N, 1]


def _fold_bn(gamma, beta, mean, var, eps=1e-5):
    scale = gamma / jnp.sqrt(var + eps)
    shift = beta - mean * scale
    return scale, shift


def learned_topk(w_emb, topk):
    """Top-k neighbours by embedding cosine similarity (as in GDN.forward)."""
    norms = jnp.linalg.norm(w_emb, axis=-1)
    cos = jnp.dot(w_emb, w_emb.T, precision=lax.Precision.HIGHEST)
    cos = cos / (norms[:, None] * norms[None, :])
    return lax.top_k(cos, topk)[1]                                   # [N, K]


def dense_edge_mask(topk_idx, n):
    """[N, N] mask: topk edges with self-loops removed, plus one self-loop/node."""
    node = jnp.arange(n)
    in_topk = jnp.any(topk_idx[:, :, None] == node[None, None, :], axis=1)  # [N, N]
    is_self = node[None, :] == node[:, None]
    return ((in_topk & (~is_self)) | is_self).astype(jnp.float32)


def gdn_pallas(data, params, topk):
    b, n, s = data.shape
    d = params["W_emb"].shape[1]
    f32 = jnp.float32
    hp = lax.Precision.HIGHEST

    x = data.astype(f32)                                             # [B, N, S]
    emb = params["W_emb"].astype(f32)                                # [N, D]

    topk_idx = learned_topk(emb, topk)
    mask = dense_edge_mask(topk_idx, n)                              # [N, N]

    # Hoisted parameter-only attention terms + folded attention projections.
    e_i = jnp.dot(emb, params["att_em_i"], precision=hp)             # [N]
    e_j = jnp.dot(emb, params["att_em_j"], precision=hp)             # [N]
    v_i = jnp.dot(params["W_lin"], params["att_i"], precision=hp)    # [S]
    v_j = jnp.dot(params["W_lin"], params["att_j"], precision=hp)    # [S]

    w_big = jnp.concatenate([
        jnp.concatenate([params["W_lin"], v_i[:, None]], axis=1),
        jnp.concatenate([jnp.zeros((1, d), f32), jnp.ones((1, 1), f32)], axis=1),
    ], axis=0).astype(f32)                                           # [S+1, D+1]
    w_row = jnp.concatenate([v_j, jnp.ones((1,), f32)])[None, :].astype(f32)  # [1, S+1]

    # Augment the windows so the emb attention terms fall out of the matmuls.
    x_aug = jnp.concatenate(
        [x, jnp.broadcast_to(e_i[None, :, None], (b, n, 1))], axis=2)   # [B, N, S+1]
    xt = jnp.swapaxes(x, 1, 2)                                          # [B, S, N]
    xt_aug = jnp.concatenate(
        [xt, jnp.broadcast_to(e_j[None, None, :], (b, 1, n))], axis=1)  # [B, S+1, N]

    # Fold BN (eval) / bias / output weights into one [4, D] parameter block.
    bn1s, bn1b = _fold_bn(params["bn1_gamma"], params["bn1_beta"],
                          params["bn1_mean"], params["bn1_var"])
    bn2s, bn2b = _fold_bn(params["bn2_gamma"], params["bn2_beta"],
                          params["bn2_mean"], params["bn2_var"])
    ep = jnp.stack([bn1s,
                    params["bias"] * bn1s + bn1b,
                    bn2b,
                    params["w_out"]], axis=0).astype(f32)            # [4, D]
    emb2 = (emb * bn2s[None, :]).astype(f32)                         # [N, D]
    b_out = params["b_out"].reshape(1).astype(f32)                   # (1,) scalar -> SMEM

    m = b * n
    s1, d1 = s + 1, d + 1

    out = pl.pallas_call(
        gdn_kernel,
        out_shape=jax.ShapeDtypeStruct((m, 1), f32),
        grid=(b,),
        in_specs=[
            pl.BlockSpec((1, n, s1), lambda i: (i, 0, 0)),           # x_aug (per batch)
            pl.BlockSpec((1, s1, n), lambda i: (i, 0, 0)),           # xt_aug (per batch)
            pl.BlockSpec((s1, d1), lambda i: (0, 0)),                # W_big (shared)
            pl.BlockSpec((1, s1), lambda i: (0, 0)),                 # w_row (shared)
            pl.BlockSpec((n, d), lambda i: (0, 0)),                  # emb2 (shared)
            pl.BlockSpec((n, n), lambda i: (0, 0)),                  # edge mask (shared)
            pl.BlockSpec((4, d), lambda i: (0, 0)),                  # epilogue params
            pl.BlockSpec(memory_space=pltpu.MemorySpace.SMEM),       # b_out scalar
        ],
        out_specs=pl.BlockSpec((n, 1), lambda i: (i, 0)),
        compiler_params=pltpu.CompilerParams(
            dimension_semantics=("parallel",)),
    )(x_aug, xt_aug, w_big, w_row, emb2, mask, ep, b_out)
    return out.reshape(b, n)


def gdn_reference(data, params, topk_idx):
    """Pure-JAX reference (gather-based) mirroring the torch forward."""
    b, n, s = data.shape
    m = b * n
    hp = lax.Precision.HIGHEST
    x_flat = data.reshape(m, s)
    emb_b = jnp.tile(params["W_emb"], (b, 1))

    node = jnp.arange(n)
    nbr = jnp.concatenate([topk_idx, node[:, None]], axis=1)         # [N, K+1]
    msk = jnp.concatenate([topk_idx != node[:, None],
                           jnp.ones((n, 1), dtype=bool)], axis=1)    # [N, K+1]
    offs = (jnp.arange(b) * n)[:, None, None]
    nbr_b = (nbr[None, :, :] + offs).reshape(m, -1)
    msk_b = jnp.tile(msk[None, :, :], (b, 1, 1)).reshape(m, -1)

    x_lin = jnp.dot(x_flat, params["W_lin"], precision=hp)
    a_tgt = jnp.dot(x_lin, params["att_i"], precision=hp) + \
        jnp.dot(emb_b, params["att_em_i"], precision=hp)
    a_src = jnp.dot(x_lin, params["att_j"], precision=hp) + \
        jnp.dot(emb_b, params["att_em_j"], precision=hp)

    logits = a_tgt[:, None] + a_src[nbr_b]
    logits = jnp.where(logits >= 0, logits, 0.2 * logits)
    logits = jnp.where(msk_b, logits, -1e30)
    alpha = jax.nn.softmax(logits, axis=-1)
    agg = jnp.einsum("mk,mkd->md", alpha, x_lin[nbr_b], precision=hp)

    bn1s, bn1b = _fold_bn(params["bn1_gamma"], params["bn1_beta"],
                          params["bn1_mean"], params["bn1_var"])
    bn2s, bn2b = _fold_bn(params["bn2_gamma"], params["bn2_beta"],
                          params["bn2_mean"], params["bn2_var"])

    gcn = agg + params["bias"][None, :]
    gcn = jnp.maximum(gcn * bn1s[None, :] + bn1b[None, :], 0.0)
    out = gcn * emb_b
    out = jnp.maximum(out * bn2s[None, :] + bn2b[None, :], 0.0)
    res = jnp.dot(out, params["w_out"][:, None], precision=hp) + params["b_out"]
    return res.reshape(b, n)


def init_params(key, n_nodes, slide_win, embed_dim):
    ks = jax.random.split(key, 20)
    f32 = jnp.float32
    return {
        "W_emb": jax.random.normal(ks[0], (n_nodes, embed_dim), f32) * 0.5,
        "W_lin": jax.random.normal(ks[1], (slide_win, embed_dim), f32) / math.sqrt(slide_win),
        "att_i": jax.random.normal(ks[2], (embed_dim,), f32) * 0.3,
        "att_j": jax.random.normal(ks[3], (embed_dim,), f32) * 0.3,
        # torch init zeros these; use small nonzero values to exercise the path
        "att_em_i": jax.random.normal(ks[4], (embed_dim,), f32) * 0.1,
        "att_em_j": jax.random.normal(ks[5], (embed_dim,), f32) * 0.1,
        "bias": jax.random.normal(ks[6], (embed_dim,), f32) * 0.1,
        "bn1_gamma": 1.0 + 0.1 * jax.random.normal(ks[7], (embed_dim,), f32),
        "bn1_beta": 0.1 * jax.random.normal(ks[8], (embed_dim,), f32),
        "bn1_mean": 0.05 * jax.random.normal(ks[9], (embed_dim,), f32),
        "bn1_var": 1.0 + 0.5 * jax.random.uniform(ks[10], (embed_dim,), f32),
        "bn2_gamma": 1.0 + 0.1 * jax.random.normal(ks[11], (embed_dim,), f32),
        "bn2_beta": 0.1 * jax.random.normal(ks[12], (embed_dim,), f32),
        "bn2_mean": 0.05 * jax.random.normal(ks[13], (embed_dim,), f32),
        "bn2_var": 1.0 + 0.5 * jax.random.uniform(ks[14], (embed_dim,), f32),
        "w_out": jax.random.normal(ks[15], (embed_dim,), f32) / math.sqrt(embed_dim),
        "b_out": jnp.array(0.1, f32),
    }


if __name__ == "__main__":
    B, N, S, D, K = 2, 16, 16, 32, 4   # batch, n_nodes, slide_win, embed_dim, topk

    key = jax.random.PRNGKey(0)
    k_data, k_par = jax.random.split(key)
    params = init_params(k_par, N, S, D)
    data = jax.random.normal(k_data, (B, N, S), jnp.float32)   # [B, N, slide_win]

    out = gdn_pallas(data, params, K)
    out = jax.block_until_ready(out)

    topk_idx = learned_topk(params["W_emb"], K)
    ref = gdn_reference(data, params, topk_idx)

    assert out.shape == (B, N), out.shape
    assert bool(jnp.all(jnp.isfinite(out)))
    assert bool(jnp.allclose(out, ref, atol=1e-2, rtol=1e-2)), \
        f"max abs err {float(jnp.max(jnp.abs(out - ref)))}"

    print("KERNEL_OK")
</pallas_src>

<mosaic_0001>
module attributes {stable_mosaic.version = 11 : i64} {
  func.func @gdn_kernel(%arg0: i32, %arg1: memref<1x16x17xf32, #tpu.memory_space<vmem>>, %arg2: memref<1x17x16xf32, #tpu.memory_space<vmem>>, %arg3: memref<17x33xf32, #tpu.memory_space<vmem>>, %arg4: memref<1x17xf32, #tpu.memory_space<vmem>>, %arg5: memref<16x32xf32, #tpu.memory_space<vmem>>, %arg6: memref<16x16xf32, #tpu.memory_space<vmem>>, %arg7: memref<4x32xf32, #tpu.memory_space<vmem>>, %arg8: memref<1xf32, #tpu.memory_space<smem>>, %arg9: memref<16x1xf32, #tpu.memory_space<vmem>>) attributes {dimension_semantics = [#tpu.dimension_semantics<parallel>], iteration_bounds = array<i64: 2>, scalar_prefetch = 0 : i64, scratch_operands = 0 : i64, tpu.core_type = #tpu.core_type<tc>, window_params = [{transform_indices = @transform_0, window_bounds = array<i64: 1, 16, 17>}, {transform_indices = @transform_1, window_bounds = array<i64: 1, 17, 16>}, {pipeline_mode = #tpu.pipeline_mode<synchronous>, transform_indices = @transform_2, window_bounds = array<i64: 17, 33>}, {pipeline_mode = #tpu.pipeline_mode<synchronous>, transform_indices = @transform_3, window_bounds = array<i64: 1, 17>}, {pipeline_mode = #tpu.pipeline_mode<synchronous>, transform_indices = @transform_4, window_bounds = array<i64: 16, 32>}, {pipeline_mode = #tpu.pipeline_mode<synchronous>, transform_indices = @transform_5, window_bounds = array<i64: 16, 16>}, {pipeline_mode = #tpu.pipeline_mode<synchronous>, transform_indices = @transform_6, window_bounds = array<i64: 4, 32>}, {transform_indices = @transform_7, window_bounds = array<i64: 1>}, {transform_indices = @transform_8, window_bounds = array<i64: 16, 1>}]} {
    %c0 = arith.constant 0 : index
    %c0_0 = arith.constant 0 : index
    %c0_1 = arith.constant 0 : index
    %0 = vector.load %arg1[%c0, %c0_0, %c0_1] : memref<1x16x17xf32, #tpu.memory_space<vmem>>, vector<1x16x17xf32>
    %1 = vector.shape_cast %0 : vector<1x16x17xf32> to vector<16x17xf32>
    %c0_2 = arith.constant 0 : index
    %c0_3 = arith.constant 0 : index
    %c0_4 = arith.constant 0 : index
    %2 = vector.load %arg2[%c0_2, %c0_3, %c0_4] : memref<1x17x16xf32, #tpu.memory_space<vmem>>, vector<1x17x16xf32>
    %3 = vector.shape_cast %2 : vector<1x17x16xf32> to vector<17x16xf32>
    %c0_5 = arith.constant 0 : index
    %c0_6 = arith.constant 0 : index
    %4 = vector.load %arg3[%c0_5, %c0_6] : memref<17x33xf32, #tpu.memory_space<vmem>>, vector<17x33xf32>
    %cst = arith.constant dense<0.000000e+00> : vector<16x33xf32>
    %5 = tpu.matmul %1, %4, %cst {dimension_numbers = #tpu.dot_dimension_numbers<[1], [0], [0], [1], [0, 0, 1, 1], [], []>} : vector<16x17xf32>, vector<17x33xf32>, vector<16x33xf32> -> vector<16x33xf32>
    %6 = vector.extract_strided_slice %5 {offsets = [0, 0], sizes = [16, 32], strides = [1, 1]} : vector<16x33xf32> to vector<16x32xf32>
    %7 = vector.extract_strided_slice %5 {offsets = [0, 32], sizes = [16, 1], strides = [1, 1]} : vector<16x33xf32> to vector<16x1xf32>
    %c0_7 = arith.constant 0 : index
    %c0_8 = arith.constant 0 : index
    %8 = vector.load %arg4[%c0_7, %c0_8] : memref<1x17xf32, #tpu.memory_space<vmem>>, vector<1x17xf32>
    %cst_9 = arith.constant dense<0.000000e+00> : vector<1x16xf32>
    %9 = tpu.matmul %8, %3, %cst_9 {dimension_numbers = #tpu.dot_dimension_numbers<[1], [0], [0], [1], [0, 0, 1, 1], [], []>} : vector<1x17xf32>, vector<17x16xf32>, vector<1x16xf32> -> vector<1x16xf32>
    %c0_10 = arith.constant 0 : index
    %c0_11 = arith.constant 0 : index
    %10 = vector.load %arg6[%c0_10, %c0_11] : memref<16x16xf32, #tpu.memory_space<vmem>>, vector<16x16xf32>
    %11 = vector.broadcast %7 : vector<16x1xf32> to vector<16x16xf32>
    %12 = vector.broadcast %9 : vector<1x16xf32> to vector<16x16xf32>
    %13 = arith.addf %11, %12 : vector<16x16xf32>
    %cst_12 = arith.constant 0.000000e+00 : f32
    %14 = vector.broadcast %cst_12 : f32 to vector<16x16xf32>
    %15 = arith.cmpf oge, %13, %14 : vector<16x16xf32>
    %cst_13 = arith.constant 2.000000e-01 : f32
    %16 = vector.broadcast %cst_13 : f32 to vector<16x16xf32>
    %17 = arith.mulf %16, %13 : vector<16x16xf32>
    %18 = arith.select %15, %13, %17 : vector<16x16xi1>, vector<16x16xf32>
    %cst_14 = arith.constant 5.000000e-01 : f32
    %19 = vector.broadcast %cst_14 : f32 to vector<16x16xf32>
    %20 = arith.cmpf ogt, %10, %19 : vector<16x16xf32>
    %cst_15 = arith.constant -1.000000e+30 : f32
    %21 = vector.broadcast %cst_15 : f32 to vector<16x16xf32>
    %22 = arith.select %20, %18, %21 : vector<16x16xi1>, vector<16x16xf32>
    %cst_16 = arith.constant dense<0xFF800000> : vector<16xf32>
    %23 = vector.multi_reduction <maximumf>, %22, %cst_16 [1] : vector<16x16xf32> to vector<16xf32>
    %24 = vector.shape_cast %23 : vector<16xf32> to vector<16x1xf32>
    %25 = vector.broadcast %24 : vector<16x1xf32> to vector<16x16xf32>
    %26 = arith.subf %22, %25 : vector<16x16xf32>
    %27 = math.exp %26 : vector<16x16xf32>
    %28 = arith.mulf %27, %10 : vector<16x16xf32>
    %cst_17 = arith.constant dense<0.000000e+00> : vector<16xf32>
    %29 = vector.multi_reduction <add>, %28, %cst_17 [1] : vector<16x16xf32> to vector<16xf32>
    %30 = vector.shape_cast %29 : vector<16xf32> to vector<16x1xf32>
    %31 = tpu.reciprocal %30 {approx = true} : vector<16x1xf32> -> vector<16x1xf32>
    %32 = vector.broadcast %31 : vector<16x1xf32> to vector<16x16xf32>
    %33 = arith.mulf %28, %32 : vector<16x16xf32>
    %cst_18 = arith.constant dense<0.000000e+00> : vector<16x32xf32>
    %34 = tpu.matmul %33, %6, %cst_18 {dimension_numbers = #tpu.dot_dimension_numbers<[1], [0], [0], [1], [0, 0, 1, 1], [], []>} : vector<16x16xf32>, vector<16x32xf32>, vector<16x32xf32> -> vector<16x32xf32>
    %c0_19 = arith.constant 0 : index
    %c0_20 = arith.constant 0 : index
    %35 = vector.load %arg7[%c0_19, %c0_20] : memref<4x32xf32, #tpu.memory_space<vmem>>, vector<4x32xf32>
    %36 = vector.extract_strided_slice %35 {offsets = [0, 0], sizes = [1, 32], strides = [1, 1]} : vector<4x32xf32> to vector<1x32xf32>
    %37 = vector.broadcast %36 : vector<1x32xf32> to vector<16x32xf32>
    %38 = arith.mulf %34, %37 : vector<16x32xf32>
    %39 = vector.extract_strided_slice %35 {offsets = [1, 0], sizes = [1, 32], strides = [1, 1]} : vector<4x32xf32> to vector<1x32xf32>
    %40 = vector.broadcast %39 : vector<1x32xf32> to vector<16x32xf32>
    %41 = arith.addf %38, %40 : vector<16x32xf32>
    %cst_21 = arith.constant 0.000000e+00 : f32
    %42 = vector.broadcast %cst_21 : f32 to vector<16x32xf32>
    %43 = arith.maximumf %41, %42 : vector<16x32xf32>
    %c0_22 = arith.constant 0 : index
    %c0_23 = arith.constant 0 : index
    %44 = vector.load %arg5[%c0_22, %c0_23] : memref<16x32xf32, #tpu.memory_space<vmem>>, vector<16x32xf32>
    %45 = arith.mulf %43, %44 : vector<16x32xf32>
    %46 = vector.extract_strided_slice %35 {offsets = [2, 0], sizes = [1, 32], strides = [1, 1]} : vector<4x32xf32> to vector<1x32xf32>
    %47 = vector.broadcast %46 : vector<1x32xf32> to vector<16x32xf32>
    %48 = arith.addf %45, %47 : vector<16x32xf32>
    %cst_24 = arith.constant 0.000000e+00 : f32
    %49 = vector.broadcast %cst_24 : f32 to vector<16x32xf32>
    %50 = arith.maximumf %48, %49 : vector<16x32xf32>
    %51 = vector.extract_strided_slice %35 {offsets = [3, 0], sizes = [1, 32], strides = [1, 1]} : vector<4x32xf32> to vector<1x32xf32>
    %52 = vector.broadcast %51 : vector<1x32xf32> to vector<16x32xf32>
    %53 = arith.mulf %50, %52 : vector<16x32xf32>
    %cst_25 = arith.constant dense<0.000000e+00> : vector<16xf32>
    %54 = vector.multi_reduction <add>, %53, %cst_25 [1] : vector<16x32xf32> to vector<16xf32>
    %55 = vector.shape_cast %54 : vector<16xf32> to vector<16x1xf32>
    %c0_26 = arith.constant 0 : index
    %56 = memref.load %arg8[%c0_26] : memref<1xf32, #tpu.memory_space<smem>>
    %57 = vector.broadcast %56 : f32 to vector<16x1xf32>
    %58 = arith.addf %55, %57 : vector<16x1xf32>
    %c0_27 = arith.constant 0 : index
    %c0_28 = arith.constant 0 : index
    %59 = vector.load %arg9[%c0_27, %c0_28] : memref<16x1xf32, #tpu.memory_space<vmem>>, vector<16x1xf32>
    tpu.vector_store %arg9[%c0_27, %c0_28], %58 {strides = array<i32>} : memref<16x1xf32, #tpu.memory_space<vmem>>, vector<16x1xf32>,
    return
  }
  func.func @transform_0(%arg0: i32) -> (i32, i32, i32) {
    %c0_i32 = arith.constant 0 : i32
    %c0_i32_0 = arith.constant 0 : i32
    %c0_i32_1 = arith.constant 0 : i32
    return %arg0, %c0_i32, %c0_i32_0 : i32, i32, i32
  }
  func.func @transform_1(%arg0: i32) -> (i32, i32, i32) {
    %c0_i32 = arith.constant 0 : i32
    %c0_i32_0 = arith.constant 0 : i32
    %c0_i32_1 = arith.constant 0 : i32
    return %arg0, %c0_i32, %c0_i32_0 : i32, i32, i32
  }
  func.func @transform_2(%arg0: i32) -> (i32, i32) {
    %c0_i32 = arith.constant 0 : i32
    %c0_i32_0 = arith.constant 0 : i32
    %c0_i32_1 = arith.constant 0 : i32
    return %c0_i32, %c0_i32_0 : i32, i32
  }
  func.func @transform_3(%arg0: i32) -> (i32, i32) {
    %c0_i32 = arith.constant 0 : i32
    %c0_i32_0 = arith.constant 0 : i32
    %c0_i32_1 = arith.constant 0 : i32
    return %c0_i32, %c0_i32_0 : i32, i32
  }
  func.func @transform_4(%arg0: i32) -> (i32, i32) {
    %c0_i32 = arith.constant 0 : i32
    %c0_i32_0 = arith.constant 0 : i32
    %c0_i32_1 = arith.constant 0 : i32
    return %c0_i32, %c0_i32_0 : i32, i32
  }
  func.func @transform_5(%arg0: i32) -> (i32, i32) {
    %c0_i32 = arith.constant 0 : i32
    %c0_i32_0 = arith.constant 0 : i32
    %c0_i32_1 = arith.constant 0 : i32
    return %c0_i32, %c0_i32_0 : i32, i32
  }
  func.func @transform_6(%arg0: i32) -> (i32, i32) {
    %c0_i32 = arith.constant 0 : i32
    %c0_i32_0 = arith.constant 0 : i32
    %c0_i32_1 = arith.constant 0 : i32
    return %c0_i32, %c0_i32_0 : i32, i32
  }
  func.func @transform_7(%arg0: i32) -> i32 {
    %c0_i32 = arith.constant 0 : i32
    %c0_i32_0 = arith.constant 0 : i32
    return %c0_i32 : i32
  }
  func.func @transform_8(%arg0: i32) -> (i32, i32) {
    %c0_i32 = arith.constant 0 : i32
    %c0_i32_0 = arith.constant 0 : i32
    return %arg0, %c0_i32 : i32, i32
  }
}

</mosaic_0001>

<llo_original>
// kernel: tpu_custom_call.1
$region0: #{tpu_custom_call.1}
  #allocation0 [shape = 'u32[]', space=smem, size = 0x4, offset = 0x4, fixed_abs, tag = 'smem constant byte address 0x4 - core index']
  #allocation1 [shape = 'u32[72,128]{1,0:T(1,128)}', space=vmem, size = 0x9000, scoped, tag = 'internal scratch']
  #allocation2 [shape = 'f32[1]{0:T(128)S(6)}', space=smem, size = 0x200, scoped, tag = 'scoped memory for tpu_custom_call.1']
  %s0 = inlined_call_operand.vmem [shape: f32[2,16,17], index: 0, kind: input, shape index: {}]
  %s1 = inlined_call_operand.vmem [shape: f32[2,17,16], index: 1, kind: input, shape index: {}]
  %s2 = inlined_call_operand.vmem [shape: f32[17,33], index: 2, kind: input, shape index: {}]
  %s3 = inlined_call_operand.vmem [shape: f32[1,17], index: 3, kind: input, shape index: {}]
  %s4 = inlined_call_operand.vmem [shape: f32[16,32], index: 4, kind: input, shape index: {}]
  %s5 = inlined_call_operand.hbm [shape: f32[16,16], index: 5, kind: input, shape index: {}]
  %s6 = inlined_call_operand.vmem [shape: f32[4,32], index: 6, kind: input, shape index: {}]
  %s7 = inlined_call_operand.<no memory space> [shape: f32[1], index: 7, kind: input, shape index: {}]
  %s8 = inlined_call_operand.vmem [shape: f32[32,1], index: 8, kind: output, shape index: {}]
  %s9 = sld [smem:[#allocation0]]
  $region69: #{tpu_custom_call.1} parent=0
    _
  %s11 = ssub.s32 1, %s9
  %s12 = scalar_select 0, %s11, %s9
  %13 = sst [smem:[#allocation2]] %s7
  $region1: #{tpu_custom_call.1} parent=0
    #allocation3 [shape = 'u8[8192]{0}', space=vmem, size = 0x2000, scoped, tag = 'input window, operand 5, single buffered']
    #allocation4 [shape = 's32[2]{0}', space=sflag, size = 0x8, scoped, tag = 'scoped memory for tpu_custom_call.1']
    %14 = vsyncpa [#allocation4], 0
    loop: start=0, step=1, limit=4
    $region2: #{tpu_custom_call.1} parent=1 // loop_pre_header
      _
    $region3: #{tpu_custom_call.1} parent=1 // loop_header
      %s16 = sphi 0, %s20
      %p17 = scmp.ge.s32.totalorder %s16, 4
      %s26 = sphi 0, %s28
      %s29 = sphi 0, %s26
      %s30 = sphi 0, %s29
      %s46 = sphi 0, %s30
      %s52 = sphi 0, %s54
      %s55 = sphi 0, %s52
      %s56 = sphi 0, %s55
      %s72 = sphi 0, %s56
      %s76 = sphi 0, %s76
      %s78 = sphi 0, %s76
      %s79 = sphi 0, %s78
      %s93 = sphi 0, %s79
      %s97 = sphi 0, %s97
      %s99 = sphi 0, %s97
      %s100 = sphi 0, %s99
      %s114 = sphi 0, %s100
      %s118 = sphi 0, %s118
      %s120 = sphi 0, %s118
      %s121 = sphi 0, %s120
      %s135 = sphi 0, %s121
      %s139 = sphi 0, %s139
      %s141 = sphi 0, %s139
      %s142 = sphi 0, %s141
      %s156 = sphi 0, %s142
      %s160 = sphi 0, %s160
      %s162 = sphi 0, %s160
      %s163 = sphi 0, %s162
      %s177 = sphi 0, %s163
      %s181 = sphi 0, %s181
      %s183 = sphi 0, %s181
      %s184 = sphi 0, %s183
      %s198 = sphi 0, %s184
      %s204 = sphi 0, %s206
      %s207 = sphi 0, %s204
      %s208 = sphi 0, %s207
      %s224 = sphi 0, %s208
    $region4: #{tpu_custom_call.1} parent=1 // loop_header_branch
      %19 = sbr.rel (%p17) target = $region8
    $region5: #{tpu_custom_call.1} parent=1 // loop_body
      %s21 = ssub.s32 %s16, 1
      %s22 = ssub.s32 %s16, 2
      %s23 = sadd.s32 %s16, 1
      %s24 = ssub.s32 %s16, %s23
      %p25 = scmp.eq.s32.totalorder %s24, 0
      %s27 = sadd.s32 %s26, 1
      %s28 = scalar_select %p25, %s26, %s27
      %p31 = pneg %p25
      %p32 = scmp.eq.s32.totalorder %s16, 1
      %p33 = por %p31, %p32
      %p34 = scmp.ne.s32.totalorder %s26, %s29
      %p35 = scmp.eq.s32.totalorder %s16, 0
      %p36 = por %p34, %p35
      %p37 = scmp.ne.s32.totalorder %s26, %s29
      %p38 = scmp.eq.s32.totalorder %s21, 1
      %p39 = por %p37, %p38
      %p40 = scmp.ne.s32.totalorder %s29, %s30
      %p41 = scmp.eq.s32.totalorder %s21, 0
      %p42 = por %p40, %p41
      %p43 = scmp.ne.s32.totalorder %s29, %s30
      %p44 = scmp.eq.s32.totalorder %s22, 1
      %p45 = por %p43, %p44
      %p47 = scmp.ne.s32.totalorder %s30, %s46
      %p48 = scmp.eq.s32.totalorder %s22, 0
      %p49 = por %p47, %p48
      %s50 = ssub.s32 %s16, %s23
      %p51 = scmp.eq.s32.totalorder %s50, 0
      %s53 = sadd.s32 %s52, 1
      %s54 = scalar_select %p51, %s52, %s53
      %p57 = pneg %p51
      %p58 = scmp.eq.s32.totalorder %s16, 1
      %p59 = por %p57, %p58
      %p60 = scmp.ne.s32.totalorder %s52, %s55
      %p61 = scmp.eq.s32.totalorder %s16, 0
      %p62 = por %p60, %p61
      %p63 = scmp.ne.s32.totalorder %s52, %s55
      %p64 = scmp.eq.s32.totalorder %s21, 1
      %p65 = por %p63, %p64
      %p66 = scmp.ne.s32.totalorder %s55, %s56
      %p67 = scmp.eq.s32.totalorder %s21, 0
      %p68 = por %p66, %p67
      %p69 = scmp.ne.s32.totalorder %s55, %s56
      %p70 = scmp.eq.s32.totalorder %s22, 1
      %p71 = por %p69, %p70
      %p73 = scmp.ne.s32.totalorder %s56, %s72
      %p74 = scmp.eq.s32.totalorder %s22, 0
      %p75 = por %p73, %p74
      %s77 = sadd.s32 %s76, 1
      %p80 = scmp.eq.s32.totalorder %s16, 1
      %p81 = scmp.ne.s32.totalorder %s76, %s78
      %p82 = scmp.eq.s32.totalorder %s16, 0
      %p83 = por %p81, %p82
      %p84 = scmp.ne.s32.totalorder %s76, %s78
      %p85 = scmp.eq.s32.totalorder %s21, 1
      %p86 = por %p84, %p85
      %p87 = scmp.ne.s32.totalorder %s78, %s79
      %p88 = scmp.eq.s32.totalorder %s21, 0
      %p89 = por %p87, %p88
      %p90 = scmp.ne.s32.totalorder %s78, %s79
      %p91 = scmp.eq.s32.totalorder %s22, 1
      %p92 = por %p90, %p91
      %p94 = scmp.ne.s32.totalorder %s79, %s93
      %p95 = scmp.eq.s32.totalorder %s22, 0
      %p96 = por %p94, %p95
      %s98 = sadd.s32 %s97, 1
      %p101 = scmp.eq.s32.totalorder %s16, 1
      %p102 = scmp.ne.s32.totalorder %s97, %s99
      %p103 = scmp.eq.s32.totalorder %s16, 0
      %p104 = por %p102, %p103
      %p105 = scmp.ne.s32.totalorder %s97, %s99
      %p106 = scmp.eq.s32.totalorder %s21, 1
      %p107 = por %p105, %p106
      %p108 = scmp.ne.s32.totalorder %s99, %s100
      %p109 = scmp.eq.s32.totalorder %s21, 0
      %p110 = por %p108, %p109
      %p111 = scmp.ne.s32.totalorder %s99, %s100
      %p112 = scmp.eq.s32.totalorder %s22, 1
      %p113 = por %p111, %p112
      %p115 = scmp.ne.s32.totalorder %s100, %s114
      %p116 = scmp.eq.s32.totalorder %s22, 0
      %p117 = por %p115, %p116
      %s119 = sadd.s32 %s118, 1
      %p122 = scmp.eq.s32.totalorder %s16, 1
      %p123 = scmp.ne.s32.totalorder %s118, %s120
      %p124 = scmp.eq.s32.totalorder %s16, 0
      %p125 = por %p123, %p124
      %p126 = scmp.ne.s32.totalorder %s118, %s120
      %p127 = scmp.eq.s32.totalorder %s21, 1
      %p128 = por %p126, %p127
      %p129 = scmp.ne.s32.totalorder %s120, %s121
      %p130 = scmp.eq.s32.totalorder %s21, 0
      %p131 = por %p129, %p130
      %p132 = scmp.ne.s32.totalorder %s120, %s121
      %p133 = scmp.eq.s32.totalorder %s22, 1
      %p134 = por %p132, %p133
      %p136 = scmp.ne.s32.totalorder %s121, %s135
      %p137 = scmp.eq.s32.totalorder %s22, 0
      %p138 = por %p136, %p137
      %s140 = sadd.s32 %s139, 1
      %p143 = scmp.eq.s32.totalorder %s16, 1
      %p144 = scmp.ne.s32.totalorder %s139, %s141
      %p145 = scmp.eq.s32.totalorder %s16, 0
      %p146 = por %p144, %p145
      %p147 = scmp.ne.s32.totalorder %s139, %s141
      %p148 = scmp.eq.s32.totalorder %s21, 1
      %p149 = por %p147, %p148
      %p150 = scmp.ne.s32.totalorder %s141, %s142
      %p151 = scmp.eq.s32.totalorder %s21, 0
      %p152 = por %p150, %p151
      %p153 = scmp.ne.s32.totalorder %s141, %s142
      %p154 = scmp.eq.s32.totalorder %s22, 1
      %p155 = por %p153, %p154
      %p157 = scmp.ne.s32.totalorder %s142, %s156
      %p158 = scmp.eq.s32.totalorder %s22, 0
      %p159 = por %p157, %p158
      %s161 = sadd.s32 %s160, 1
      %p164 = scmp.eq.s32.totalorder %s16, 1
      %p165 = scmp.ne.s32.totalorder %s160, %s162
      %p166 = scmp.eq.s32.totalorder %s16, 0
      %p167 = por %p165, %p166
      %p168 = scmp.ne.s32.totalorder %s160, %s162
      %p169 = scmp.eq.s32.totalorder %s21, 1
      %p170 = por %p168, %p169
      %p171 = scmp.ne.s32.totalorder %s162, %s163
      %p172 = scmp.eq.s32.totalorder %s21, 0
      %p173 = por %p171, %p172
      %p174 = scmp.ne.s32.totalorder %s162, %s163
      %p175 = scmp.eq.s32.totalorder %s22, 1
      %p176 = por %p174, %p175
      %p178 = scmp.ne.s32.totalorder %s163, %s177
      %p179 = scmp.eq.s32.totalorder %s22, 0
      %p180 = por %p178, %p179
      %s182 = sadd.s32 %s181, 1
      %p185 = scmp.eq.s32.totalorder %s16, 1
      %p186 = scmp.ne.s32.totalorder %s181, %s183
      %p187 = scmp.eq.s32.totalorder %s16, 0
      %p188 = por %p186, %p187
      %p189 = scmp.ne.s32.totalorder %s181, %s183
      %p190 = scmp.eq.s32.totalorder %s21, 1
      %p191 = por %p189, %p190
      %p192 = scmp.ne.s32.totalorder %s183, %s184
      %p193 = scmp.eq.s32.totalorder %s21, 0
      %p194 = por %p192, %p193
      %p195 = scmp.ne.s32.totalorder %s183, %s184
      %p196 = scmp.eq.s32.totalorder %s22, 1
      %p197 = por %p195, %p196
      %p199 = scmp.ne.s32.totalorder %s184, %s198
      %p200 = scmp.eq.s32.totalorder %s22, 0
      %p201 = por %p199, %p200
      %s202 = ssub.s32 %s16, %s23
      %p203 = scmp.eq.s32.totalorder %s202, 0
      %s205 = sadd.s32 %s204, 1
      %s206 = scalar_select %p203, %s204, %s205
      %p209 = pneg %p203
      %p210 = scmp.eq.s32.totalorder %s16, 1
      %p211 = por %p209, %p210
      %p212 = scmp.ne.s32.totalorder %s204, %s207
      %p213 = scmp.eq.s32.totalorder %s16, 0
      %p214 = por %p212, %p213
      %p215 = scmp.ne.s32.totalorder %s204, %s207
      %p216 = scmp.eq.s32.totalorder %s21, 1
      %p217 = por %p215, %p216
      %p218 = scmp.ne.s32.totalorder %s207, %s208
      %p219 = scmp.eq.s32.totalorder %s21, 0
      %p220 = por %p218, %p219
      %p221 = scmp.ne.s32.totalorder %s207, %s208
      %p222 = scmp.eq.s32.totalorder %s22, 1
      %p223 = por %p221, %p222
      %p225 = scmp.ne.s32.totalorder %s208, %s224
      %p226 = scmp.eq.s32.totalorder %s22, 0
      %p227 = por %p225, %p226
      %p228 = scmp.le.s32.totalorder 1, %s16
      %p229 = scmp.lt.s32.totalorder %s16, 3
      %p230 = pnand %p228, %p229
      %p231 = pneg %p230
      // Predicated region
      $region9: #{tpu_custom_call.1} parent=5 // pred_check
        _
      $region10: #{tpu_custom_call.1} parent=5 // pred_check_branch
        %233 = sbr.rel (%p230) target = $region12
      $region11: #{tpu_custom_call.1} parent=5 // pred_region
        %s234 = ssub.s32 %s16, 1
        // Predicated region
        $region13: #{tpu_custom_call.1} parent=11 // pred_check
          %p235 = pneg %p89
        $region14: #{tpu_custom_call.1} parent=11 // pred_check_branch
          %237 = sbr.rel (%p235) target = $region16
        $region15: #{tpu_custom_call.1} parent=11 // pred_region
          _
        $region16: #{tpu_custom_call.1} parent=11 // pred_fallthru
          _
        // Predicated region
        $region17: #{tpu_custom_call.1} parent=11 // pred_check
          %p238 = pneg %p110
        $region18: #{tpu_custom_call.1} parent=11 // pred_check_branch
          %240 = sbr.rel (%p238) target = $region20
        $region19: #{tpu_custom_call.1} parent=11 // pred_region
          _
        $region20: #{tpu_custom_call.1} parent=11 // pred_fallthru
          _
        // Predicated region
        $region21: #{tpu_custom_call.1} parent=11 // pred_check
          %p241 = pneg %p131
        $region22: #{tpu_custom_call.1} parent=11 // pred_check_branch
          %243 = sbr.rel (%p241) target = $region24
        $region23: #{tpu_custom_call.1} parent=11 // pred_region
          _
        $region24: #{tpu_custom_call.1} parent=11 // pred_fallthru
          _
        // Predicated region
        $region25: #{tpu_custom_call.1} parent=11 // pred_check
          %p244 = pneg %p152
        $region26: #{tpu_custom_call.1} parent=11 // pred_check_branch
          %246 = sbr.rel (%p244) target = $region28
        $region27: #{tpu_custom_call.1} parent=11 // pred_region
          %248 = vsyncadd [#allocation4], 0
          %s249 = sshll.u32 %s5, 4
          %s250 = int_to_ptr.hbm [resolvable:$true] %s249
          %s251 = sshll.u32 [#allocation3], 4
          %s252 = int_to_ptr.vmem [resolvable:$true] %s251
          %257 = dma.hbm_to_vmem [thread:$0]  %s250, 256, %s252, [#allocation4], 128, 128, 8
        $region28: #{tpu_custom_call.1} parent=11 // pred_fallthru
          _
        // Predicated region
        $region29: #{tpu_custom_call.1} parent=11 // pred_check
          %p258 = pneg %p173
        $region30: #{tpu_custom_call.1} parent=11 // pred_check_branch
          %260 = sbr.rel (%p258) target = $region32
        $region31: #{tpu_custom_call.1} parent=11 // pred_region
          _
        $region32: #{tpu_custom_call.1} parent=11 // pred_fallthru
          _
        // Predicated region
        $region33: #{tpu_custom_call.1} parent=11 // pred_check
          %p261 = pneg %p194
        $region34: #{tpu_custom_call.1} parent=11 // pred_check_branch
          %263 = sbr.rel (%p261) target = $region36
        $region35: #{tpu_custom_call.1} parent=11 // pred_region
          _
        $region36: #{tpu_custom_call.1} parent=11 // pred_fallthru
          _
      $region12: #{tpu_custom_call.1} parent=5 // pred_fallthru
        _
      %p264 = scmp.lt.s32.totalorder %s16, 2
      // Predicated region
      $region37: #{tpu_custom_call.1} parent=5 // pred_check
        %p265 = pneg %p264
      $region38: #{tpu_custom_call.1} parent=5 // pred_check_branch
        %267 = sbr.rel (%p265) target = $region40
      $region39: #{tpu_custom_call.1} parent=5 // pred_region
        // Predicated region
        $region41: #{tpu_custom_call.1} parent=39 // pred_check
          %p268 = pneg %p36
        $region42: #{tpu_custom_call.1} parent=39 // pred_check_branch
          %270 = sbr.rel (%p268) target = $region44
        $region43: #{tpu_custom_call.1} parent=39 // pred_region
          %p271 = scmp.lt.s32.totalorder %s16, 1
          %s272 = scalar_select %p271, %s16, 1
          %s273 = smul.addr %s272, 2
          %s274 = smul.addr %s273, 8
          %s275 = scalar_lea.vmem %s0, %s274
        $region44: #{tpu_custom_call.1} parent=39 // pred_fallthru
          _
        // Predicated region
        $region45: #{tpu_custom_call.1} parent=39 // pred_check
          %p276 = pneg %p62
        $region46: #{tpu_custom_call.1} parent=39 // pred_check_branch
          %278 = sbr.rel (%p276) target = $region48
        $region47: #{tpu_custom_call.1} parent=39 // pred_region
          %p279 = scmp.lt.s32.totalorder %s16, 1
          %s280 = scalar_select %p279, %s16, 1
          %s281 = smul.addr %s280, 3
          %s282 = smul.addr %s281, 8
          %s283 = scalar_lea.vmem %s1, %s282
        $region48: #{tpu_custom_call.1} parent=39 // pred_fallthru
          _
      $region40: #{tpu_custom_call.1} parent=5 // pred_fallthru
        _
      %p284 = scmp.le.s32.totalorder 1, %s16
      %p285 = scmp.lt.s32.totalorder %s16, 3
      %p286 = pnand %p284, %p285
      %p287 = pneg %p286
      // Predicated region
      $region49: #{tpu_custom_call.1} parent=5 // pred_check
        _
      $region50: #{tpu_custom_call.1} parent=5 // pred_check_branch
        %289 = sbr.rel (%p286) target = $region52
      $region51: #{tpu_custom_call.1} parent=5 // pred_region
        %s290 = ssub.s32 %s16, 1
        // Predicated region
        $region53: #{tpu_custom_call.1} parent=51 // pred_check
          %p291 = pneg %p152
        $region54: #{tpu_custom_call.1} parent=51 // pred_check_branch
          %293 = sbr.rel (%p291) target = $region56
        $region55: #{tpu_custom_call.1} parent=51 // pred_region
          %295 = dma.done [#allocation4], 256
        $region56: #{tpu_custom_call.1} parent=51 // pred_fallthru
          _
        %p296 = scmp.lt.s32.totalorder %s21, 1
        %s297 = scalar_select %p296, %s21, 1
        %s298 = smul.addr %s297, 2
        %s299 = smul.addr %s298, 8
        %s300 = scalar_lea.vmem %s0, %s299
        %p301 = pneg %p42
        %p302 = pneg %p39
        %p303 = scmp.lt.s32.totalorder %s21, 1
        %s304 = scalar_select %p303, %s21, 1
        %s305 = smul.addr %s304, 3
        %s306 = smul.addr %s305, 8
        %s307 = scalar_lea.vmem %s1, %s306
        %p308 = pneg %p68
        %p309 = pneg %p65
        %p310 = pneg %p89
        %p311 = pneg %p86
        %p312 = pneg %p110
        %p313 = pneg %p107
        %p314 = pneg %p131
        %p315 = pneg %p128
        %p316 = pneg %p152
        %p317 = pneg %p149
        %p318 = pneg %p173
        %p319 = pneg %p170
        %p320 = pneg %p194
        %p321 = pneg %p191
        %p322 = pneg %p220
        %p323 = pneg %p217
        %s324 = smul.u32 2, %s21
        %p325 = scmp.lt.s32.totalorder %s324, 3
        %s326 = scalar_select %p325, %s324, 3
        %s327 = smul.addr %s326, 8
        %s328 = scalar_lea.vmem %s8, %s327
        %p329 = scmp.lt.s32.totalorder %s21, 1
        %s330 = scalar_select %p329, %s21, 1
        %s331 = smul.addr %s330, 2
        %s332 = smul.addr %s331, 8
        %s333 = scalar_lea.vmem %s0, %s332
        %p334 = scmp.lt.s32.totalorder %s21, 1
        %s335 = scalar_select %p334, %s21, 1
        %s336 = smul.addr %s335, 3
        %s337 = smul.addr %s336, 8
        %s338 = scalar_lea.vmem %s1, %s337
        %s339 = smul.u32 2, %s21
        %p340 = scmp.lt.s32.totalorder %s339, 3
        %s341 = scalar_select %p340, %s339, 3
        %s342 = smul.addr %s341, 8
        %s343 = scalar_lea.vmem %s8, %s342
        %s344 = smul.u32 2, %s21
        %v345 = vld [vmem:[%s333] sm:$0xff]
        %v346 = vld [vmem:[%s333 + $0x8] sm:$0xff]
        %v347 = vld [vmem:[%s338] sm:$0xff]
        %v348 = vld [vmem:[%s338 + $0x8] sm:$0xff]
        %v349 = vld [vmem:[%s338 + $0x10] sm:$0x1]
        %v350 = vld [vmem:[%s2] sm:$0xff]
        %v351 = vld [vmem:[%s2 + $0x8] sm:$0xff]
        %v352 = vld [vmem:[%s2 + $0x10] sm:$0x1]
        %vm353 = vcmask 138240
        %v355 = vsel %vm353, %v345, 0
        %v358 = vsel %vm353, %v346, 0
        %vm360 = vcmask 1040384
        %v362 = vsel %vm360, %v352, 0
        %364 = vmatpush.msra.mxu0 0.0
        %365 = vmatpush.msra.mxu0 0.0
        %366 = vmatpush.msra.mxu0 0.0
        %367 = vmatpush.msra.mxu0 0.0
        %368 = vmatpush.msra.mxu0 0.0
        %369 = vmatpush.msra.mxu0 0.0
        %370 = vmatpush.msra.mxu0 0.0
        %371 = vmatpush.msra.mxu0 0.0
        %372 = vmatpush.msra.mxu0 0.0
        %373 = vmatpush.msra.mxu0 0.0
        %374 = vmatpush.msra.mxu0 0.0
        %375 = vmatpush.msra.mxu0 0.0
        %376 = vmatpush.msra.mxu0 0.0
        %377 = vmatpush.msra.mxu0 %v362
        %378 = vmatpush.msra.mxu0 %v351
        %379 = vmatpush.msra.mxu0 %v350
        %380 = vmatmul.f32.gmra.mxu0 %v355
        %v381 = vpop.f32.mrf.mxu0
        %v382 = vadd.f32 0.0, %v381
        %383 = vmatmul.f32.gmra.mxu0 %v358
        %v384 = vpop.f32.mrf.mxu0
        %v385 = vadd.f32 0.0, %v384
        %386 = vdwg.mxu0
        %v387 = vld [vmem:[%s3] sm:$0x1]
        %v389 = vsel %vm353, %v387, 0
        %v392 = vsel %vm360, %v349, 0
        %394 = vmatpush.msra.mxu0 0.0
        %395 = vmatpush.msra.mxu0 0.0
        %396 = vmatpush.msra.mxu0 0.0
        %397 = vmatpush.msra.mxu0 0.0
        %398 = vmatpush.msra.mxu0 0.0
        %399 = vmatpush.msra.mxu0 0.0
        %400 = vmatpush.msra.mxu0 0.0
        %401 = vmatpush.msra.mxu0 0.0
        %402 = vmatpush.msra.mxu0 0.0
        %403 = vmatpush.msra.mxu0 0.0
        %404 = vmatpush.msra.mxu0 0.0
        %405 = vmatpush.msra.mxu0 0.0
        %406 = vmatpush.msra.mxu0 0.0
        %407 = vmatpush.msra.mxu0 %v392
        %408 = vmatpush.msra.mxu0 %v348
        %409 = vmatpush.msra.mxu0 %v347
        %410 = vmatmul.f32.gmra.mxu0 %v389
        %v411 = vpop.f32.mrf.mxu0
        %v412 = vadd.f32 0.0, %v411
        %413 = vdwg.mxu0
        %v414 = vld [vmem:[#allocation3] sm:$0xff]
        %v415 = vld [vmem:[#allocation3 + $0x8] sm:$0xff]
        %417 = vset.pattern.permute.xlu0 32
        %418 = vperm.xlu0 %417, %v382
        %v419 = vpop.permute.xlu0 %418
        %422 = vset.pattern.permute.xlu0 32
        %423 = vperm.xlu0 %422, %v385
        %v424 = vpop.permute.xlu0 %423
        %v426 = vperm.slane %v412, 0
        %v427 = vadd.f32 %v419, %v426
        %v428 = vadd.f32 %v424, %v426
        %vm429 = vcmp.ge.f32.partialorder %v427, 0.0
        %vm430 = vcmp.ge.f32.partialorder %v428, 0.0
        %v431 = vmul.f32 %v427, 0.2
        %v432 = vmul.f32 %v428, 0.2
        %v433 = vsel %vm429, %v427, %v431
        %v434 = vsel %vm430, %v428, %v432
        %vm435 = vcmp.gt.f32.partialorder %v414, 0.5
        %vm436 = vcmp.gt.f32.partialorder %v415, 0.5
        %v437 = vsel %vm435, %v433, -1e+30
        %v438 = vsel %vm436, %v434, -1e+30
        %vm439 = vcmask 130048
        %v440 = vsel %vm439, %v437, -inf
        %441 = vmax.xlane.f32.xlu0 %v440
        %v442 = vpop.xlane.xlu0 %441
        %v443 = vsel %vm439, %v438, -inf
        %444 = vmax.xlane.f32.xlu0 %v443
        %v445 = vpop.xlane.xlu0 %444
        %v446 = vsub.f32 %v437, %v442
        %v447 = vsub.f32 %v438, %v445
        %v448 = vmul.f32 %v446, 1.442695
        %v449 = vpow.pop %v448
        %v450 = vmul.f32 %v447, 1.442695
        %v451 = vpow.pop %v450
        %v452 = vmul.f32 %v449, %v414
        %v453 = vmul.f32 %v451, %v415
        %v454 = vsel %vm439, %v452, 0.0
        %455 = vadd.xlane.f32.xlu0 %v454
        %v456 = vpop.xlane.xlu0 %455
        %v457 = vsel %vm439, %v453, 0.0
        %458 = vadd.xlane.f32.xlu0 %v457
        %v459 = vpop.xlane.xlu0 %458
        %v460 = vrcp.pop %v456
        %v461 = vrcp.pop %v459
        %v462 = vmul.f32 %v452, %v460
        %v463 = vmul.f32 %v453, %v461
        %v465 = vsel %vm439, %v462, 0
        %v468 = vsel %vm439, %v463, 0
        %470 = vmatpush.msra.mxu0 0.0
        %471 = vmatpush.msra.mxu0 0.0
        %472 = vmatpush.msra.mxu0 0.0
        %473 = vmatpush.msra.mxu0 0.0
        %474 = vmatpush.msra.mxu0 0.0
        %475 = vmatpush.msra.mxu0 0.0
        %476 = vmatpush.msra.mxu0 0.0
        %477 = vmatpush.msra.mxu0 0.0
        %478 = vmatpush.msra.mxu0 0.0
        %479 = vmatpush.msra.mxu0 0.0
        %480 = vmatpush.msra.mxu0 0.0
        %481 = vmatpush.msra.mxu0 0.0
        %482 = vmatpush.msra.mxu0 0.0
        %483 = vmatpush.msra.mxu0 0.0
        %484 = vmatpush.msra.mxu0 %v385
        %485 = vmatpush.msra.mxu0 %v382
        %486 = vmatmul.f32.gmra.mxu0 %v465
        %v487 = vpop.f32.mrf.mxu0
        %v488 = vadd.f32 0.0, %v487
        %489 = vmatmul.f32.gmra.mxu0 %v468
        %v490 = vpop.f32.mrf.mxu0
        %v491 = vadd.f32 0.0, %v490
        %492 = vdwg.mxu0
        %v493 = vld [vmem:[%s6] sm:$0xf]
        %v494 = vperm.slane %v493, 0
        %v495 = vmul.f32 %v488, %v494
        %v496 = vmul.f32 %v491, %v494
        %v497 = vperm.slane %v493, 1
        %v498 = vadd.f32 %v495, %v497
        %v499 = vadd.f32 %v496, %v497
        %v500 = vmax.f32 %v498, 0.0
        %v501 = vmax.f32 %v499, 0.0
        %v502 = vld [vmem:[%s4] sm:$0xff]
        %v503 = vld [vmem:[%s4 + $0x8] sm:$0xff]
        %v504 = vmul.f32 %v500, %v502
        %v505 = vmul.f32 %v501, %v503
        %v506 = vperm.slane %v493, 2
        %v507 = vadd.f32 %v504, %v506
        %v508 = vadd.f32 %v505, %v506
        %v509 = vmax.f32 %v507, 0.0
        %v510 = vmax.f32 %v508, 0.0
        %v511 = vperm.slane %v493, 3
        %v512 = vmul.f32 %v509, %v511
        %v513 = vmul.f32 %v510, %v511
        %vm514 = vcmask 261120
        %v515 = vsel %vm514, %v512, 0.0
        %516 = vadd.xlane.f32.xlu0 %v515
        %v517 = vpop.xlane.xlu0 %516
        %v518 = vsel %vm514, %v513, 0.0
        %519 = vadd.xlane.f32.xlu0 %v518
        %v520 = vpop.xlane.xlu0 %519
        %s521 = sld [smem:[#allocation2]]
        %v522 = vstv %s521
        %v523 = vadd.f32 %v517, %v522
        %v524 = vadd.f32 %v520, %v522
        %vm525 = vcmask 7168
        %526 = vst.msk [vmem:[%s343] sm:$0xff] %vm525, %v523
        %527 = vst.msk [vmem:[%s343 + $0x8] sm:$0xff] %vm525, %v524
        %s528 = smul.u32 2, %s21
        %p529 = scmp.lt.s32.totalorder %s528, 3
        %s530 = scalar_select %p529, %s528, 3
        %s531 = smul.addr %s530, 8
        %s532 = scalar_lea.vmem %s8, %s531
        // Predicated region
        $region57: #{tpu_custom_call.1} parent=51 // pred_check
          %p533 = pneg %p217
        $region58: #{tpu_custom_call.1} parent=51 // pred_check_branch
          %535 = sbr.rel (%p533) target = $region60
        $region59: #{tpu_custom_call.1} parent=51 // pred_region
          %s536 = smul.u32 2, %s21
        $region60: #{tpu_custom_call.1} parent=51 // pred_fallthru
          _
      $region52: #{tpu_custom_call.1} parent=5 // pred_fallthru
        _
      %p537 = scmp.le.s32.totalorder 2, %s16
      // Predicated region
      $region61: #{tpu_custom_call.1} parent=5 // pred_check
        %p538 = pneg %p537
      $region62: #{tpu_custom_call.1} parent=5 // pred_check_branch
        %540 = sbr.rel (%p538) target = $region64
      $region63: #{tpu_custom_call.1} parent=5 // pred_region
        %s541 = ssub.s32 %s16, 2
        // Predicated region
        $region65: #{tpu_custom_call.1} parent=63 // pred_check
          %p542 = pneg %p223
        $region66: #{tpu_custom_call.1} parent=63 // pred_check_branch
          %544 = sbr.rel (%p542) target = $region68
        $region67: #{tpu_custom_call.1} parent=63 // pred_region
          %s545 = smul.u32 2, %s22
          %p546 = scmp.lt.s32.totalorder %s545, 3
          %s547 = scalar_select %p546, %s545, 3
          %s548 = smul.addr %s547, 8
          %s549 = scalar_lea.vmem %s8, %s548
        $region68: #{tpu_custom_call.1} parent=63 // pred_fallthru
          _
      $region64: #{tpu_custom_call.1} parent=5 // pred_fallthru
        _
    $region6: #{tpu_custom_call.1} parent=1 // loop_footer
      %s20 = sadd.s32 1, %s16
    $region7: #{tpu_custom_call.1} parent=1 // loop_footer_branch
      %15 = sbr.rel target = $region3
    $region8: #{tpu_custom_call.1} parent=1 // loop_exit
      _
    %550 = vsyncpa [#allocation4], 1
    %s551 = scalar_lea.sflag [#allocation4], 1
    %552 = vsyncpa %s551, 1

</llo_original>
